<compile_context>
chip_gen: v7x
topology: tpu7x:2x2x1
jax: 0.10.0
libtpu: 0.0.40
codegen_flags: <defaults>
</compile_context>

<pallas_src>
import jax
import jax.numpy as jnp
from jax.experimental import pallas as pl
from jax.experimental.pallas import tpu as pltpu

LANE = 128
DEFAULT_TILE = 1024
MIN_TILE = 256
# Budget for the double-buffered bf16 A column block (2 bufs * N_pad * TILE_N * 2B).
A_BLOCK_BUDGET = 32 * 1024 * 1024
VMEM_LIMIT_BYTES = 48 * 1024 * 1024      # > v5e 16 MiB / v6e 32 MiB defaults, < v7x 64 MiB phys.


def _round_up(x, m):
    return (x + m - 1) // m * m


def _choose_tiling(n):
    """Return (n_pad, tile_n): n_pad % tile_n == 0, tile_n % 128 == 0, A block fits budget."""
    if n <= DEFAULT_TILE:
        n_pad = _round_up(n, LANE)
        return n_pad, n_pad               # single full-extent tile
    n_pad = _round_up(n, LANE)
    tile = DEFAULT_TILE
    while tile > MIN_TILE and 2 * n_pad * tile * 2 > A_BLOCK_BUDGET:
        tile //= 2
    n_pad = _round_up(n, tile)
    return n_pad, tile


# ----------------------------- Fused Pallas kernel ----------------------------
def _gcn_fused_kernel(a_ref, xw1t_ref, b1t_ref, w2_ref, out_ref):
    """One streaming pass over A column tiles; both GCN layers fused.

    out^T (this core's partial row) accumulates across the inner grid axis.
    """
    @pl.when(pl.program_id(1) == 0)
    def _():
        out_ref[...] = jnp.zeros_like(out_ref)

    a_tile = a_ref[...]                                        # [N_pad, TILE_N] bf16

    # Layer 1 (transposed): h1^T[:, tile] = relu(XW1^T @ A[:, tile] + b1)
    h1t = jnp.dot(xw1t_ref[...], a_tile,
                  preferred_element_type=jnp.float32)          # [H, TILE_N] f32
    h1t = jnp.maximum(h1t + b1t_ref[...], 0.0)

    # Layer-2 projection on VPU/XLU (an M=1 f32 MXU matmul only wastes weight pushes):
    xw2t_tile = jnp.sum(w2_ref[...] * h1t, axis=0, keepdims=True)   # [1, TILE_N] f32

    # Layer 2 aggregation using A's symmetry:
    #   out^T += xw2^T[:, tile] @ A[tile, :]  ==  xw2t_tile @ A[:, tile]^T
    # Contract the lane axes directly; no transposed copy of A is materialized.
    out_ref[...] += jax.lax.dot_general(
        xw2t_tile.astype(jnp.bfloat16), a_tile,
        dimension_numbers=(((1,), (1,)), ((), ())),
        preferred_element_type=jnp.float32)                    # [1, N_pad] f32


# ------------------------------- Wrapper --------------------------------------
def prepare_adjacency(a_norm, n_pad):
    """Pad + bf16-cast A_hat ONCE per (static) graph; keeps the O(N^2) pad/cast
    out of the per-forward hot path."""
    n = a_norm.shape[0]
    pad = n_pad - n
    return jnp.pad(a_norm, ((0, pad), (0, pad))).astype(jnp.bfloat16)


def gcn_forward(a_bf, x, w1, b1, w2, b2):
    """a_bf: pre-padded bf16 normalized adjacency [N_pad, N_pad] (see prepare_adjacency)."""
    n = x.shape[0]
    hidden = w1.shape[1]
    n_pad, tile_n = _choose_tiling(n)
    assert a_bf.shape == (n_pad, n_pad), (a_bf.shape, n_pad)
    num_tiles = n_pad // tile_n
    num_cores = 2 if (num_tiles >= 2 and num_tiles % 2 == 0) else 1
    tiles_per_core = num_tiles // num_cores
    pad = n_pad - n

    # Tiny dense operands (O(N*H) or smaller) -> fully VMEM-resident.
    xw1t_bf = jnp.pad((x @ w1).T, ((0, 0), (0, pad))).astype(jnp.bfloat16)  # [H, N_pad]
    b1t = b1.reshape(hidden, 1).astype(jnp.float32)                          # [H, 1]
    w2c = w2.reshape(hidden, 1).astype(jnp.float32)                          # [H, 1]

    a_spec = pl.BlockSpec((n_pad, tile_n),
                          lambda c, i: (0, c * tiles_per_core + i))

    cost = pl.CostEstimate(
        flops=2 * hidden * n_pad * n_pad + 2 * n_pad * n_pad + 4 * hidden * n_pad,
        transcendentals=0,
        bytes_accessed=2 * n_pad * n_pad + 2 * hidden * n_pad + 4 * num_cores * n_pad,
    )

    partials = pl.pallas_call(
        _gcn_fused_kernel,
        out_shape=jax.ShapeDtypeStruct((num_cores, n_pad), jnp.float32),
        grid=(num_cores, tiles_per_core),
        in_specs=[
            a_spec,
            pl.BlockSpec((hidden, n_pad), lambda c, i: (0, 0)),
            pl.BlockSpec((hidden, 1), lambda c, i: (0, 0)),
            pl.BlockSpec((hidden, 1), lambda c, i: (0, 0)),
        ],
        out_specs=pl.BlockSpec((1, n_pad), lambda c, i: (c, 0)),
        compiler_params=pltpu.CompilerParams(
            dimension_semantics=("parallel", "arbitrary"),
            vmem_limit_bytes=VMEM_LIMIT_BYTES),
        cost_estimate=cost,
    )(a_bf, xw1t_bf, b1t, w2c)

    out_t = partials.sum(axis=0) + b2[0]          # [N_pad], O(N) epilogue
    return out_t[:n].reshape(n, 1)


# ------------------------------ Glue (plain JAX) -------------------------------
def build_normalized_adjacency(edge_index, num_nodes):
    """Dense D^{-1/2} (A + I) D^{-1/2}, matching PyG gcn_norm (add_remaining_self_loops)."""
    src, dst = edge_index
    a = jnp.zeros((num_nodes, num_nodes), dtype=jnp.float32)
    a = a.at[dst, src].add(1.0)                                   # message j -> i
    idx = jnp.arange(num_nodes)
    diag = a[idx, idx]
    a = a.at[idx, idx].set(jnp.where(diag > 0, diag, 1.0))        # remaining self-loops
    deg = a.sum(axis=1)
    dinv = jnp.where(deg > 0, 1.0 / jnp.sqrt(deg), 0.0)
    return dinv[:, None] * a * dinv[None, :]


def glorot(key, shape):
    fan_in, fan_out = shape
    limit = jnp.sqrt(6.0 / (fan_in + fan_out))
    return jax.random.uniform(key, shape, jnp.float32, -limit, limit)


if __name__ == "__main__":
    key = jax.random.PRNGKey(0)
    k_x, k_w1, k_w2, k_b1, k_b2 = jax.random.split(key, 5)

    num_nodes, in_ch, hid_ch, out_ch = 8, 3, 16, 1

    # graph: bidirectional path 0-1-2-3-4-5-6-7
    edge_index = jnp.array(
        [[0, 1, 1, 2, 2, 3, 3, 4, 4, 5, 5, 6, 6, 7],
         [1, 0, 2, 1, 3, 2, 4, 3, 5, 4, 6, 5, 7, 6]], dtype=jnp.int32)

    x = jax.random.normal(k_x, (num_nodes, in_ch), dtype=jnp.float32)

    w1 = glorot(k_w1, (in_ch, hid_ch))
    w2 = glorot(k_w2, (hid_ch, out_ch))
    # Small nonzero biases to exercise the bias path (PyG default init is zeros).
    b1 = 0.1 * jax.random.normal(k_b1, (hid_ch,), dtype=jnp.float32)
    b2 = 0.1 * jax.random.normal(k_b2, (out_ch,), dtype=jnp.float32)

    a_norm = build_normalized_adjacency(edge_index, num_nodes)

    # Per-graph preprocessing (pad + bf16 cast) hoisted out of the forward call.
    n_pad, _ = _choose_tiling(num_nodes)
    a_bf = jax.block_until_ready(prepare_adjacency(a_norm, n_pad))

    fwd = jax.jit(gcn_forward)
    out = jax.block_until_ready(fwd(a_bf, x, w1, b1, w2, b2))

    # Pure-f32 JAX reference (kernel streams A / XW1 in bf16 -> loose tolerance).
    h1_ref = jnp.maximum(a_norm @ (x @ w1) + b1, 0.0)
    ref = a_norm @ (h1_ref @ w2) + b2
    assert out.shape == (num_nodes, out_ch)
    assert jnp.allclose(out, ref, atol=2e-2, rtol=2e-2), (out, ref)

    print("KERNEL_OK")
</pallas_src>

<mosaic_0001>
module attributes {stable_mosaic.version = 11 : i64} {
  func.func @_gcn_fused_kernel(%arg0: i32, %arg1: i32, %arg2: memref<128x128xbf16, #tpu.memory_space<vmem>>, %arg3: memref<16x128xbf16, #tpu.memory_space<vmem>>, %arg4: memref<16x1xf32, #tpu.memory_space<vmem>>, %arg5: memref<16x1xf32, #tpu.memory_space<vmem>>, %arg6: memref<1x128xf32, #tpu.memory_space<vmem>>) attributes {dimension_semantics = [#tpu.dimension_semantics<parallel>, #tpu.dimension_semantics<arbitrary>], iteration_bounds = array<i64: 1, 1>, scalar_prefetch = 0 : i64, scratch_operands = 0 : i64, tpu.core_type = #tpu.core_type<tc>, window_params = [{transform_indices = @transform_0, window_bounds = array<i64: 128, 128>}, {pipeline_mode = #tpu.pipeline_mode<synchronous>, transform_indices = @transform_1, window_bounds = array<i64: 16, 128>}, {pipeline_mode = #tpu.pipeline_mode<synchronous>, transform_indices = @transform_2, window_bounds = array<i64: 16, 1>}, {pipeline_mode = #tpu.pipeline_mode<synchronous>, transform_indices = @transform_3, window_bounds = array<i64: 16, 1>}, {transform_indices = @transform_4, window_bounds = array<i64: 1, 128>}]} {
    %c0_i32 = arith.constant 0 : i32
    %0 = arith.cmpi eq, %arg1, %c0_i32 : i32
    %1 = arith.extui %0 : i1 to i32
    %c0_i32_0 = arith.constant 0 : i32
    %2 = arith.cmpi ne, %1, %c0_i32_0 : i32
    scf.if %2 {
      %cst_15 = arith.constant 0.000000e+00 : f32
      %21 = vector.broadcast %cst_15 : f32 to vector<1x128xf32>
      %c0_16 = arith.constant 0 : index
      %c0_17 = arith.constant 0 : index
      %22 = vector.load %arg6[%c0_16, %c0_17] : memref<1x128xf32, #tpu.memory_space<vmem>>, vector<1x128xf32>
      tpu.vector_store %arg6[%c0_16, %c0_17], %21 {strides = array<i32>} : memref<1x128xf32, #tpu.memory_space<vmem>>, vector<1x128xf32>,
    } else {
    }
    %c0 = arith.constant 0 : index
    %c0_1 = arith.constant 0 : index
    %3 = vector.load %arg2[%c0, %c0_1] : memref<128x128xbf16, #tpu.memory_space<vmem>>, vector<128x128xbf16>
    %c0_2 = arith.constant 0 : index
    %c0_3 = arith.constant 0 : index
    %4 = vector.load %arg3[%c0_2, %c0_3] : memref<16x128xbf16, #tpu.memory_space<vmem>>, vector<16x128xbf16>
    %cst = arith.constant dense<0.000000e+00> : vector<16x128xf32>
    %5 = tpu.matmul %4, %3, %cst {dimension_numbers = #tpu.dot_dimension_numbers<[1], [0], [0], [1], [0, 0, 1, 1], [], []>} : vector<16x128xbf16>, vector<128x128xbf16>, vector<16x128xf32> -> vector<16x128xf32>
    %c0_4 = arith.constant 0 : index
    %c0_5 = arith.constant 0 : index
    %6 = vector.load %arg4[%c0_4, %c0_5] : memref<16x1xf32, #tpu.memory_space<vmem>>, vector<16x1xf32>
    %7 = vector.broadcast %6 : vector<16x1xf32> to vector<16x128xf32>
    %8 = arith.addf %5, %7 : vector<16x128xf32>
    %cst_6 = arith.constant 0.000000e+00 : f32
    %9 = vector.broadcast %cst_6 : f32 to vector<16x128xf32>
    %10 = arith.maximumf %8, %9 : vector<16x128xf32>
    %c0_7 = arith.constant 0 : index
    %c0_8 = arith.constant 0 : index
    %11 = vector.load %arg5[%c0_7, %c0_8] : memref<16x1xf32, #tpu.memory_space<vmem>>, vector<16x1xf32>
    %12 = vector.broadcast %11 : vector<16x1xf32> to vector<16x128xf32>
    %13 = arith.mulf %12, %10 : vector<16x128xf32>
    %cst_9 = arith.constant dense<0.000000e+00> : vector<128xf32>
    %14 = vector.multi_reduction <add>, %13, %cst_9 [0] : vector<16x128xf32> to vector<128xf32>
    %15 = vector.shape_cast %14 : vector<128xf32> to vector<1x128xf32>
    %c0_10 = arith.constant 0 : index
    %c0_11 = arith.constant 0 : index
    %16 = vector.load %arg6[%c0_10, %c0_11] : memref<1x128xf32, #tpu.memory_space<vmem>>, vector<1x128xf32>
    %17 = arith.truncf %15 : vector<1x128xf32> to vector<1x128xbf16>
    %cst_12 = arith.constant dense<0.000000e+00> : vector<1x128xf32>
    %18 = tpu.matmul %17, %3, %cst_12 {dimension_numbers = #tpu.dot_dimension_numbers<[1], [1], [0], [0], [0, 0, 1, 0], [], []>} : vector<1x128xbf16>, vector<128x128xbf16>, vector<1x128xf32> -> vector<1x128xf32>
    %19 = arith.addf %16, %18 : vector<1x128xf32>
    %c0_13 = arith.constant 0 : index
    %c0_14 = arith.constant 0 : index
    %20 = vector.load %arg6[%c0_13, %c0_14] : memref<1x128xf32, #tpu.memory_space<vmem>>, vector<1x128xf32>
    tpu.vector_store %arg6[%c0_13, %c0_14], %19 {strides = array<i32>} : memref<1x128xf32, #tpu.memory_space<vmem>>, vector<1x128xf32>,
    return
  }
  func.func @transform_0(%arg0: i32, %arg1: i32) -> (i32, i32) {
    %c1_i32 = arith.constant 1 : i32
    %0 = arith.muli %arg0, %c1_i32 : i32
    %1 = arith.addi %0, %arg1 : i32
    %c0_i32 = arith.constant 0 : i32
    %c0_i32_0 = arith.constant 0 : i32
    return %c0_i32, %1 : i32, i32
  }
  func.func @transform_1(%arg0: i32, %arg1: i32) -> (i32, i32) {
    %c0_i32 = arith.constant 0 : i32
    %c0_i32_0 = arith.constant 0 : i32
    %c0_i32_1 = arith.constant 0 : i32
    return %c0_i32, %c0_i32_0 : i32, i32
  }
  func.func @transform_2(%arg0: i32, %arg1: i32) -> (i32, i32) {
    %c0_i32 = arith.constant 0 : i32
    %c0_i32_0 = arith.constant 0 : i32
    %c0_i32_1 = arith.constant 0 : i32
    return %c0_i32, %c0_i32_0 : i32, i32
  }
  func.func @transform_3(%arg0: i32, %arg1: i32) -> (i32, i32) {
    %c0_i32 = arith.constant 0 : i32
    %c0_i32_0 = arith.constant 0 : i32
    %c0_i32_1 = arith.constant 0 : i32
    return %c0_i32, %c0_i32_0 : i32, i32
  }
  func.func @transform_4(%arg0: i32, %arg1: i32) -> (i32, i32) {
    %c0_i32 = arith.constant 0 : i32
    %c0_i32_0 = arith.constant 0 : i32
    return %arg0, %c0_i32 : i32, i32
  }
}

</mosaic_0001>

<llo_original>
// kernel: gcn_forward.1
$region0: #{gcn_forward.1}
  #allocation0 [shape = 'u32[]', space=smem, size = 0x4, offset = 0x4, fixed_abs, tag = 'smem constant byte address 0x4 - core index']
  #allocation1 [shape = 'u32[144,128]{1,0:T(1,128)}', space=vmem, size = 0x12000, scoped, tag = 'internal scratch']
  %s0 = inlined_call_operand.vmem [shape: bf16[128,128], index: 0, kind: input, shape index: {}]
  %s1 = inlined_call_operand.vmem [shape: bf16[16,128], index: 1, kind: input, shape index: {}]
  %s2 = inlined_call_operand.vmem [shape: f32[16,1], index: 2, kind: input, shape index: {}]
  %s3 = inlined_call_operand.vmem [shape: f32[16,1], index: 3, kind: input, shape index: {}]
  %s4 = inlined_call_operand.vmem [shape: f32[1,128], index: 4, kind: output, shape index: {}]
  %s5 = sld [smem:[#allocation0]]
  $region30: #{gcn_forward.1} parent=0
    _
  %s7 = ssub.s32 1, %s5
  %s8 = scalar_select 0, %s7, %s5
  // Predicated region
  $region2: #{gcn_forward.1} parent=0 // pred_check
    _
  $region3: #{gcn_forward.1} parent=0 // pred_check_branch
    %10 = sbr.rel (0) target = $region5
  $region4: #{gcn_forward.1} parent=0 // pred_region
    %s11 = sadd.s32 0, 0
    %p12 = scmp.lt.s32.totalorder %s11, 0
    %s13 = scalar_select %p12, %s11, 0
    %s14 = smul.addr %s13, 4
    %s15 = scalar_lea.vmem %s0, %s14
    %s16 = sadd.s32 0, 0
  $region5: #{gcn_forward.1} parent=0 // pred_fallthru
    _
  // Predicated region
  $region6: #{gcn_forward.1} parent=0 // pred_check
    _
  $region7: #{gcn_forward.1} parent=0 // pred_check_branch
    %18 = sbr.rel (0) target = $region9
  $region8: #{gcn_forward.1} parent=0 // pred_region
    _
  $region9: #{gcn_forward.1} parent=0 // pred_fallthru
    _
  // Predicated region
  $region10: #{gcn_forward.1} parent=0 // pred_check
    _
  $region11: #{gcn_forward.1} parent=0 // pred_check_branch
    %20 = sbr.rel (0) target = $region13
  $region12: #{gcn_forward.1} parent=0 // pred_region
    _
  $region13: #{gcn_forward.1} parent=0 // pred_fallthru
    _
  // Predicated region
  $region14: #{gcn_forward.1} parent=0 // pred_check
    _
  $region15: #{gcn_forward.1} parent=0 // pred_check_branch
    %22 = sbr.rel (0) target = $region17
  $region16: #{gcn_forward.1} parent=0 // pred_region
    _
  $region17: #{gcn_forward.1} parent=0 // pred_fallthru
    _
  %s23 = sadd.s32 0, 0
  %p24 = scmp.lt.s32.totalorder %s23, 0
  %s25 = scalar_select %p24, %s23, 0
  %s26 = smul.addr %s25, 4
  %s27 = scalar_lea.vmem %s0, %s26
  %s28 = sadd.s32 0, 0
  %p29 = scmp.lt.s32.totalorder %s28, 0
  %s30 = scalar_select %p29, %s28, 0
  %s31 = smul.addr %s30, 4
  %s32 = scalar_lea.vmem %s0, %s31
  %s33 = sadd.s32 0, 0
  %p35 = scmp.eq.s32.totalorder 0, 0
  // Predicated region
  $region18: #{gcn_forward.1} parent=0 // pred_check
    %p36 = pneg %p35
  $region19: #{gcn_forward.1} parent=0 // pred_check_branch
    %38 = sbr.rel (%p36) target = $region21
  $region20: #{gcn_forward.1} parent=0 // pred_region
    %39 = vst [vmem:[%s4] sm:$0x1] 0.0
  $region21: #{gcn_forward.1} parent=0 // pred_fallthru
    _
  %v40 = vld [vmem:[%s32] sm:$0xf]
  %v41 = vld [vmem:[%s32 + $0x4] sm:$0xf]
  %v42 = vld [vmem:[%s32 + $0x8] sm:$0xf]
  %v43 = vld [vmem:[%s32 + $0xc] sm:$0xf]
  %v44 = vld [vmem:[%s32 + $0x10] sm:$0xf]
  %v45 = vld [vmem:[%s32 + $0x14] sm:$0xf]
  %v46 = vld [vmem:[%s32 + $0x18] sm:$0xf]
  %v47 = vld [vmem:[%s32 + $0x1c] sm:$0xf]
  %v48 = vld [vmem:[%s32 + $0x20] sm:$0xf]
  %v49 = vld [vmem:[%s32 + $0x24] sm:$0xf]
  %v50 = vld [vmem:[%s32 + $0x28] sm:$0xf]
  %v51 = vld [vmem:[%s32 + $0x2c] sm:$0xf]
  %v52 = vld [vmem:[%s32 + $0x30] sm:$0xf]
  %v53 = vld [vmem:[%s32 + $0x34] sm:$0xf]
  %v54 = vld [vmem:[%s32 + $0x38] sm:$0xf]
  %v55 = vld [vmem:[%s32 + $0x3c] sm:$0xf]
  %v56 = vld [vmem:[%s1] sm:$0xf]
  %v57 = vld [vmem:[%s1 + $0x4] sm:$0xf]
  %v58 = vld [vmem:[%s2] sm:$0xff]
  %v59 = vld [vmem:[%s2 + $0x8] sm:$0xff]
  %61 = vset.pattern.permute.xlu0 0
  %62 = vperm.xlu0 %61, %v58
  %v63 = vpop.permute.xlu0 %62
  %66 = vset.pattern.permute.xlu0 0
  %67 = vperm.xlu0 %66, %v59
  %v68 = vpop.permute.xlu0 %67
  %v72 = vunpack.c.l.b16 %v56
  %v73 = vunpack.c.l.b16 %v57
  %v74 = vpack.c.b16 %v73, %v72
  %v92 = vunpack.c.l.b16 %v40
  %v93 = vunpack.c.l.b16 %v41
  %v94 = vunpack.c.l.b16 %v42
  %v95 = vunpack.c.l.b16 %v43
  %v96 = vunpack.c.l.b16 %v44
  %v97 = vunpack.c.l.b16 %v45
  %v98 = vunpack.c.l.b16 %v46
  %v99 = vunpack.c.l.b16 %v47
  %v100 = vunpack.c.l.b16 %v48
  %v101 = vunpack.c.l.b16 %v49
  %v102 = vunpack.c.l.b16 %v50
  %v103 = vunpack.c.l.b16 %v51
  %v104 = vunpack.c.l.b16 %v52
  %v105 = vunpack.c.l.b16 %v53
  %v106 = vunpack.c.l.b16 %v54
  %v107 = vunpack.c.l.b16 %v55
  %v108 = vpack.c.b16 %v93, %v92
  %v109 = vpack.c.b16 %v95, %v94
  %v110 = vpack.c.b16 %v97, %v96
  %v111 = vpack.c.b16 %v99, %v98
  %v112 = vpack.c.b16 %v101, %v100
  %v113 = vpack.c.b16 %v103, %v102
  %v114 = vpack.c.b16 %v105, %v104
  %v115 = vpack.c.b16 %v107, %v106
  %124 = vmatprep.subr.bf16.mxu0 0
  %125 = vmatpush1.bf16.msra.mxu0 %v108
  %126 = vmatprep.subr.bf16.mxu0 0
  %127 = vmatpush1.bf16.msra.mxu0 %v109
  %128 = vmatprep.subr.bf16.mxu0 0
  %129 = vmatpush1.bf16.msra.mxu0 %v110
  %130 = vmatprep.subr.bf16.mxu0 0
  %131 = vmatpush1.bf16.msra.mxu0 %v111
  %132 = vmatprep.subr.bf16.mxu0 0
  %133 = vmatpush1.bf16.msra.mxu0 %v112
  %134 = vmatprep.subr.bf16.mxu0 0
  %135 = vmatpush1.bf16.msra.mxu0 %v113
  %136 = vmatprep.subr.bf16.mxu0 0
  %137 = vmatpush1.bf16.msra.mxu0 %v114
  %138 = vmatprep.subr.bf16.mxu0 0
  %139 = vmatpush1.bf16.msra.mxu0 %v115
  %140 = vmatprep.subr.bf16.mxu0 0
  %141 = vmatpush1.bf16.msra.mxu0 0
  %142 = vmatprep.subr.bf16.mxu0 0
  %143 = vmatpush1.bf16.msra.mxu0 0
  %144 = vmatprep.subr.bf16.mxu0 0
  %145 = vmatpush1.bf16.msra.mxu0 0
  %146 = vmatprep.subr.bf16.mxu0 0
  %147 = vmatpush1.bf16.msra.mxu0 0
  %148 = vmatprep.subr.bf16.mxu0 0
  %149 = vmatpush1.bf16.msra.mxu0 0
  %150 = vmatprep.subr.bf16.mxu0 0
  %151 = vmatpush1.bf16.msra.mxu0 0
  %152 = vmatprep.subr.bf16.mxu0 0
  %153 = vmatpush1.bf16.msra.mxu0 0
  %154 = vmatprep.subr.bf16.mxu0 0
  %155 = vmatpush1.bf16.msra.mxu0 0
  %156 = vmatprep.mubr.bf16.mxu0 0
  %157 = vmatmul.mubr.bf16.gmra.mrb[0].mxu0 %v74
  %v158 = vpop.f32.mrb[0].mxu0
  %v159 = vadd.f32 %v63, %v158
  %v160 = vpop.f32.mrb[0].mxu0
  %v161 = vpop.f32.mrb[0].mxu0
  %v162 = vadd.f32 %v68, %v161
  %v163 = vpop.f32.mrb[0].mxu0
  %164 = vdwg.mxu0
  %v165 = vmax.f32 %v159, 0.0
  %v166 = vmax.f32 %v162, 0.0
  %v167 = vld [vmem:[%s3] sm:$0xff]
  %v168 = vld [vmem:[%s3 + $0x8] sm:$0xff]
  %170 = vset.pattern.permute.xlu0 0
  %171 = vperm.xlu0 %170, %v167
  %v172 = vpop.permute.xlu0 %171
  %175 = vset.pattern.permute.xlu0 0
  %176 = vperm.xlu0 %175, %v168
  %v177 = vpop.permute.xlu0 %176
  %v179 = vmul.f32 %v172, %v165
  %v180 = vmul.f32 %v177, %v166
  %v181 = vadd.f32 %v179, %v180
  %v182 = vrot.slane %v181, 4
  %v183 = vadd.f32 %v181, %v182
  %v184 = vrot.slane %v183, 2
  %v185 = vadd.f32 %v183, %v184
  %v186 = vrot.slane %v185, 1
  %v187 = vadd.f32 %v185, %v186
  %v188 = vld [vmem:[%s4] sm:$0x1]
  %v189 = vpack.c.bf16 %v187, %v187
  %190 = vmatprep.subr.bf16.mxu0 0
  %191 = vmatpush1.bf16.xpose.msra.mxu0 %v108
  %192 = vmatprep.subr.bf16.mxu0 0
  %193 = vmatpush1.bf16.xpose.msra.mxu0 %v109
  %194 = vmatprep.subr.bf16.mxu0 0
  %195 = vmatpush1.bf16.xpose.msra.mxu0 %v110
  %196 = vmatprep.subr.bf16.mxu0 0
  %197 = vmatpush1.bf16.xpose.msra.mxu0 %v111
  %198 = vmatprep.subr.bf16.mxu0 0
  %199 = vmatpush1.bf16.xpose.msra.mxu0 %v112
  %200 = vmatprep.subr.bf16.mxu0 0
  %201 = vmatpush1.bf16.xpose.msra.mxu0 %v113
  %202 = vmatprep.subr.bf16.mxu0 0
  %203 = vmatpush1.bf16.xpose.msra.mxu0 %v114
  %204 = vmatprep.subr.bf16.mxu0 0
  %205 = vmatpush1.bf16.xpose.msra.mxu0 %v115
  %206 = vmatprep.subr.bf16.mxu0 0
  %207 = vmatpush1.bf16.xpose.msra.mxu0 0
  %208 = vmatprep.subr.bf16.mxu0 0
  %209 = vmatpush1.bf16.xpose.msra.mxu0 0
  %210 = vmatprep.subr.bf16.mxu0 0
  %211 = vmatpush1.bf16.xpose.msra.mxu0 0
  %212 = vmatprep.subr.bf16.mxu0 0
  %213 = vmatpush1.bf16.xpose.msra.mxu0 0
  %214 = vmatprep.subr.bf16.mxu0 0
  %215 = vmatpush1.bf16.xpose.msra.mxu0 0
  %216 = vmatprep.subr.bf16.mxu0 0
  %217 = vmatpush1.bf16.xpose.msra.mxu0 0
  %218 = vmatprep.subr.bf16.mxu0 0
  %219 = vmatpush1.bf16.xpose.msra.mxu0 0
  %220 = vmatprep.subr.bf16.mxu0 0
  %221 = vmatpush1.bf16.xpose.msra.mxu0 0
  %222 = vmatprep.mubr.bf16.mxu0 0
  %223 = vmatmul.mubr.bf16.gmra.mrb[0].mxu0 %v189
  %v224 = vpop.f32.mrb[0].mxu0
  %v225 = vadd.f32 0.0, %v224
  %v226 = vpop.f32.mrb[0].mxu0
  %v227 = vpop.f32.mrb[0].mxu0
  %v228 = vpop.f32.mrb[0].mxu0
  %229 = vdwg.mxu0
  %v230 = vadd.f32 %v188, %v225
  %231 = vst [vmem:[%s4] sm:$0x1] %v230
  // Predicated region
  $region22: #{gcn_forward.1} parent=0 // pred_check
    _
  $region23: #{gcn_forward.1} parent=0 // pred_check_branch
    %233 = sbr.rel (0) target = $region25
  $region24: #{gcn_forward.1} parent=0 // pred_region
    _
  $region25: #{gcn_forward.1} parent=0 // pred_fallthru
    _
  // Predicated region
  $region26: #{gcn_forward.1} parent=0 // pred_check
    _
  $region27: #{gcn_forward.1} parent=0 // pred_check_branch
    %235 = sbr.rel (0) target = $region29
  $region28: #{gcn_forward.1} parent=0 // pred_region
    _
  $region29: #{gcn_forward.1} parent=0 // pred_fallthru
    _

</llo_original>
